<compile_context>
chip_gen: v7x
topology: tpu7x:2x2x1
jax: 0.10.0
libtpu: 0.0.40
codegen_flags: <defaults>
</compile_context>

<pallas_src>
import numpy as np
import jax
import jax.numpy as jnp
from jax import lax
from jax.experimental import pallas as pl
from jax.experimental.pallas import tpu as pltpu


def _round_up(x, m):
    return ((x + m - 1) // m) * m


def _vmem_capacity_bytes():
    try:
        return int(pltpu.get_tpu_info().vmem_capacity_bytes)
    except Exception:
        return 64 * 1024 * 1024   # conservative fallback (v7x per-TensorCore size)


def _tpu_generation():
    try:
        kind = jax.devices()[0].device_kind.lower()
    except Exception:
        return 6
    for g in (7, 6, 5):
        if str(g) in kind:
            return g
    return 6


def _weight_block_spec(d_in_aug, tn, index_map):
    # 3-deep buffering on the (data-dependent, per-innermost-step) expert-weight stream.
    try:
        return pl.BlockSpec((1, 1, d_in_aug, tn), index_map, pipeline_mode=pl.Buffered(3))
    except (TypeError, AttributeError):
        return pl.BlockSpec((1, 1, d_in_aug, tn), index_map)


# ---------------- kernel 1: gating projection (bf16 operands, f32 accumulation) ----------------

def _gating_kernel(x_ref, w_ref, b_ref, o_ref):
    o_ref[...] = (
        jnp.dot(x_ref[...], w_ref[...], preferred_element_type=jnp.float32) + b_ref[...]
    )


def gating_projection(x, w, b, *, tb, tg, vmem_limit):
    B_pad, D = x.shape
    G_pad = w.shape[1]
    return pl.pallas_call(
        _gating_kernel,
        out_shape=jax.ShapeDtypeStruct((B_pad, G_pad), jnp.float32),
        grid=(B_pad // tb, G_pad // tg),
        in_specs=[
            pl.BlockSpec((tb, D), lambda i, j: (i, 0)),
            pl.BlockSpec((D, tg), lambda i, j: (0, j)),
            pl.BlockSpec((1, tg), lambda i, j: (0, j)),
        ],
        out_specs=pl.BlockSpec((tb, tg), lambda i, j: (i, j)),
        compiler_params=pltpu.CompilerParams(
            dimension_semantics=("parallel", "parallel"),
            vmem_limit_bytes=vmem_limit,
        ),
    )(x, w, b)


# ---- kernel 2: per-unique-expert dense bf16 GEMM with per-row softmax weights (f32 out/acc) ----

def _moe_kernel(uid_ref, nuniq_ref, x_ref, w_ref, wslot_ref, o_ref):
    u = pl.program_id(2)  # unique-expert (reduction) axis, innermost

    @pl.when(u == 0)
    def _():
        # f32 output block is resident across the u axis and doubles as the accumulator.
        o_ref[...] = jnp.zeros_like(o_ref)

    # Padding slots (u >= n_unique) carry zero weight and a duplicated expert id (their weight
    # DMA is de-duplicated because the block index is unchanged); skip their FLOPs entirely.
    @pl.when(u < nuniq_ref[0])
    def _():
        # Per-row weight of expert slot u: softmax prob if that expert was chosen for the row,
        # else 0.  wslot block is resident across the whole reduction (one DMA per batch tile).
        lanes = lax.broadcasted_iota(jnp.int32, wslot_ref.shape, 1)
        w_col = jnp.sum(jnp.where(lanes == u, wslot_ref[...], 0.0), axis=1, keepdims=True)
        # Dense bf16 (TB, D_in_aug) @ (D_in_aug, TN) GEMM, f32 accumulation; the expert bias
        # is folded into the augmented ones-column of x, so no separate bias DMA / add.
        y = jnp.dot(x_ref[...], w_ref[0, 0], preferred_element_type=jnp.float32)
        o_ref[...] += w_col * y


def moe_average(uid, n_unique, x_aug, w_tiled, wslot, *, tb, tn, vmem_limit):
    B_pad, d_in_aug = x_aug.shape
    E, NT, _, _ = w_tiled.shape
    U_pad = wslot.shape[1]
    U = uid.shape[0]
    grid = (B_pad // tb, NT, U)

    grid_spec = pltpu.PrefetchScalarGridSpec(
        num_scalar_prefetch=2,
        grid=grid,
        in_specs=[
            # x: resident per batch tile (bf16)
            pl.BlockSpec((tb, d_in_aug), lambda bi, nj, u, uid_ref, nq_ref: (bi, 0)),
            # expert weight (+bias row): contiguous pre-tiled slab gathered by prefetched id
            _weight_block_spec(
                d_in_aug, tn,
                lambda bi, nj, u, uid_ref, nq_ref: (uid_ref[u], nj, 0, 0)),
            # per-row expert weights: resident per batch tile (f32, lane-padded)
            pl.BlockSpec((tb, U_pad), lambda bi, nj, u, uid_ref, nq_ref: (bi, 0)),
        ],
        out_specs=pl.BlockSpec((tb, tn), lambda bi, nj, u, uid_ref, nq_ref: (bi, nj)),
    )
    return pl.pallas_call(
        _moe_kernel,
        out_shape=jax.ShapeDtypeStruct((B_pad, NT * tn), jnp.float32),
        grid_spec=grid_spec,
        compiler_params=pltpu.CompilerParams(
            dimension_semantics=("parallel", "parallel", "arbitrary"),
            vmem_limit_bytes=vmem_limit,
        ),
    )(uid, n_unique, x_aug, w_tiled, wslot)


# ------------------------------------ module wrapper ------------------------------------

class RemoteMixtureOfExpertsPallas:
    _WBUF = 3  # expert-weight stream buffer depth (matches pl.Buffered(3))

    def __init__(self, *, in_features, grid_size, k_best, out_features, key,
                 allow_broadcasting=True):
        self.in_features = in_features
        self.out_features = out_features
        self.grid_size = tuple(grid_size)
        self.k_best = k_best
        self.allow_broadcasting = allow_broadcasting

        self.gen = _tpu_generation()
        self.vmem_cap = _vmem_capacity_bytes()
        self.vmem_budget = int(0.6 * self.vmem_cap)   # working-set target for tile sizing

        self.G = int(sum(grid_size))
        self.E = int(np.prod(grid_size))
        self.G_pad = _round_up(self.G, 128)              # lane-dense gating output
        self.d_in_aug = _round_up(in_features + 1, 16)   # +1 ones-column; bf16 sublane packing
        self.d_out_pad = _round_up(out_features, 128)    # lane-dense MoE output

        # tn: largest divisor of d_out_pad whose WBUF-deep bf16 weight buffers fit in ~40% of
        # the VMEM budget (keeps the gathered weight DMA as contiguous as possible).
        w_budget = int(0.4 * self.vmem_budget)
        cands = [self.d_out_pad] + [c for c in (1024, 512, 256, 128)
                                    if c < self.d_out_pad and self.d_out_pad % c == 0]
        self.tn = cands[-1]
        for tn in cands:
            if self._WBUF * self.d_in_aug * tn * 2 <= w_budget:
                self.tn = tn
                break
        self.n_out_tiles = self.d_out_pad // self.tn

        # gating column tile
        self.tg = next(t for t in (512, 256, 128) if self.G_pad % t == 0)

        kp, kb, kw, kbe = jax.random.split(key, 4)
        # gating function: nn.Linear(in_features, sum(grid_size)) (weight stored transposed)
        self.proj_w = (jax.random.normal(kp, (in_features, self.G), jnp.float32)
                       / np.sqrt(in_features)).astype(jnp.float32)
        self.proj_b = (0.01 * jax.random.normal(kb, (1, self.G), jnp.float32)).astype(jnp.float32)
        # simulated remote experts: Linear(in_features, out_features) each
        self.expert_w = (jax.random.normal(kw, (self.E, in_features, out_features), jnp.float32)
                         / np.sqrt(in_features)).astype(jnp.float32)
        self.expert_b = (0.01 * jax.random.normal(
            kbe, (self.E, 1, out_features), jnp.float32)).astype(jnp.float32)

        # Padded device layouts for the kernels (bf16 operands, f32 bias / output).
        self.proj_w_pad = (jnp.zeros((in_features, self.G_pad), jnp.float32)
                           .at[:, :self.G].set(self.proj_w).astype(jnp.bfloat16))
        self.proj_b_pad = jnp.zeros((1, self.G_pad), jnp.float32).at[:, :self.G].set(self.proj_b)

        # Augmented expert weights: rows [0:D_in] = W_e, row D_in = b_e, rest zero; D_out
        # padded; pre-tiled to (E, NT, d_in_aug, tn) so every gathered block is contiguous.
        w_aug = jnp.zeros((self.E, self.d_in_aug, self.d_out_pad), jnp.float32)
        w_aug = w_aug.at[:, :in_features, :out_features].set(self.expert_w)
        w_aug = w_aug.at[:, in_features, :out_features].set(self.expert_b[:, 0, :])
        self.w_tiled = (w_aug.reshape(self.E, self.d_in_aug, self.n_out_tiles, self.tn)
                        .transpose(0, 2, 1, 3).astype(jnp.bfloat16))

    # ---- tile-size selection -------------------------------------------------------------

    def _pick_tb(self, B, U_pad):
        align = 16  # bf16 sublane packing of the x_aug tile
        fixed = self._WBUF * self.d_in_aug * self.tn * 2          # bf16 weight buffers
        per_row = (2 * self.d_in_aug * 2                          # x_aug bf16, double-buffered
                   + 2 * U_pad * 4                                # wslot f32, double-buffered
                   + 2 * self.tn * 4)                             # f32 output block
        avail = max(self.vmem_budget - fixed, per_row * align)
        tb_fit = max(align, (avail // per_row) // align * align)
        tb_cap = 256 if self.gen >= 6 else 128   # v6e/v7x MXU M-dim is 256, v5e is 128
        tb = int(min(tb_cap, tb_fit, _round_up(B, align)))
        tb = max(align, (tb // align) * align)
        # v7x: 2 TensorCores share the "parallel" grid axes; try to expose >= 2 tiles.
        if self.gen >= 7:
            while (_round_up(B, tb) // tb) * self.n_out_tiles < 2 and tb > align:
                tb = max(align, (tb // 2) // align * align)
        return tb

    # ---- host-side glue --------------------------------------------------------------------

    def _beam_search(self, grid_scores):
        """Pruned beam search of the product grid (top-k per grid dimension, all experts
        treated as 'alive'), mirroring hivemind's beam_search + compute_expert_scores."""
        B = grid_scores[0].shape[0]
        beam_scores = jnp.zeros((B, 1), jnp.float32)
        beam_idx = jnp.zeros((B, 1), jnp.int32)
        for d, ds in enumerate(grid_scores):
            g = self.grid_size[d]
            new_scores = (beam_scores[:, :, None] + ds[:, None, :]).reshape(B, -1)
            new_idx = (beam_idx[:, :, None] * g
                       + jnp.arange(g, dtype=jnp.int32)[None, None, :]).reshape(B, -1)
            k = min(self.k_best, new_scores.shape[-1])
            beam_scores, top = lax.top_k(new_scores, k)
            beam_idx = jnp.take_along_axis(new_idx, top, axis=-1)
        # beam_scores == compute_expert_scores (sum of per-dim grid scores per chosen expert)
        return beam_idx.astype(jnp.int32), beam_scores

    def __call__(self, x):
        orig_shape = x.shape
        if x.ndim != 2:
            if not self.allow_broadcasting:
                raise ValueError("input must be 2d")
            x = x.reshape(-1, x.shape[-1])
        B, D_in = x.shape

        U = int(min(self.E, B * self.k_best))     # max number of distinct chosen experts
        U_pad = _round_up(U, 128)                 # lane-dense wslot
        tb = self._pick_tb(B, U_pad)
        B_pad = _round_up(B, tb)

        x_bf = jnp.zeros((B_pad, D_in), jnp.bfloat16).at[:B].set(x.astype(jnp.bfloat16))

        # 1) gating projection (Pallas, bf16 operands / f32 acc) -> per-dimension grid scores
        gat_est = 2 * (tb * D_in * 2 + D_in * self.tg * 2 + self.tg * 4 + tb * self.tg * 4)
        gat_limit = int(min(0.85 * self.vmem_cap, max(2 * gat_est, 32 * 1024 * 1024)))
        logits = gating_projection(x_bf, self.proj_w_pad, self.proj_b_pad,
                                   tb=tb, tg=self.tg, vmem_limit=gat_limit)[:B, :self.G]
        splits = [int(s) for s in np.cumsum(self.grid_size)[:-1]]
        grid_scores = jnp.split(logits, splits, axis=-1)

        # 2) beam search over the expert product grid + softmax (hoisted out of the kernel)
        chosen_idx, expert_logits = self._beam_search(grid_scores)       # (B, K)
        probs = jax.nn.softmax(expert_logits, axis=-1)                   # (B, K)

        # 3) collapse (B, K) choices into U unique expert slots + per-row weight matrix.
        #    NOTE (ordering matters): the one-hot is computed against the *sentinel* padding
        #    id (E), so padding slots get exactly-zero weight; only afterwards are padding
        #    ids replaced by the last real id (duplicate block index -> Pallas skips the
        #    repeated weight DMA) and their FLOPs skipped in-kernel via n_unique.
        uid = jnp.unique(chosen_idx, size=U, fill_value=self.E)
        onehot = (chosen_idx[:, :, None] == uid[None, None, :]).astype(jnp.float32)
        wslot = jnp.einsum("bku,bk->bu", onehot, probs)                  # (B, U)
        wslot_pad = jnp.zeros((B_pad, U_pad), jnp.float32).at[:B, :U].set(wslot)
        n_unique = jnp.sum(uid < self.E).astype(jnp.int32)
        last_real = uid[jnp.maximum(n_unique - 1, 0)]
        uid_safe = jnp.where(uid < self.E, uid, last_real).astype(jnp.int32)

        # 4) augmented input (bf16): ones-column folds the expert bias into the GEMM
        x_aug = jnp.zeros((B_pad, self.d_in_aug), jnp.bfloat16)
        x_aug = x_aug.at[:, :D_in].set(x_bf).at[:, D_in].set(1.0)

        moe_est = (2 * tb * self.d_in_aug * 2
                   + self._WBUF * self.d_in_aug * self.tn * 2
                   + 2 * tb * U_pad * 4
                   + 2 * tb * self.tn * 4)
        moe_limit = int(min(0.85 * self.vmem_cap, max(2 * moe_est, 32 * 1024 * 1024)))
        out = moe_average(uid_safe, n_unique.reshape(1), x_aug, self.w_tiled, wslot_pad,
                          tb=tb, tn=self.tn, vmem_limit=moe_limit)
        out = out[:B, :self.out_features]
        if len(orig_shape) != 2:
            out = out.reshape(*orig_shape[:-1], self.out_features)
        return out


# ----------------------------------------- main -----------------------------------------

if __name__ == "__main__":
    key = jax.random.PRNGKey(0)
    kx, kparams = jax.random.split(key)

    B, D_in, D_out = 8, 32, 64
    grid_size = (3, 5)          # sum(grid_size) = 8 gating logits, prod = 15 experts
    k_best = 4

    moe = RemoteMixtureOfExpertsPallas(in_features=D_in, grid_size=grid_size,
                                       k_best=k_best, out_features=D_out, key=kparams)
    x = jax.random.normal(kx, (B, D_in), jnp.float32)

    out = moe(x)
    out = jax.block_until_ready(out)

    # Pure-JAX reference of the same forward semantics, using the same bf16 operand rounding
    # with f32 accumulation so expert selection matches the kernel path exactly.
    xb = x.astype(jnp.bfloat16)
    logits = (jnp.dot(xb, moe.proj_w.astype(jnp.bfloat16),
                      preferred_element_type=jnp.float32) + moe.proj_b)
    splits = [int(s) for s in np.cumsum(grid_size)[:-1]]
    gs = jnp.split(logits, splits, axis=-1)
    idx, elog = moe._beam_search(gs)
    probs = jax.nn.softmax(elog, axis=-1)
    w_sel = moe.expert_w.astype(jnp.bfloat16)[idx]                          # (B, K, D_in, D_out)
    b_sel = moe.expert_b.astype(jnp.bfloat16).astype(jnp.float32)[idx][:, :, 0, :]
    y = jnp.einsum("bd,bkde->bke", xb, w_sel,
                   preferred_element_type=jnp.float32) + b_sel
    ref = jnp.einsum("bk,bke->be", probs, y)

    assert out.shape == (B, D_out)
    assert jnp.allclose(out, ref, atol=2e-2, rtol=2e-2), float(jnp.max(jnp.abs(out - ref)))
    print("KERNEL_OK")
</pallas_src>

<mosaic_0001>
module attributes {stable_mosaic.version = 11 : i64} {
  func.func @_gating_kernel(%arg0: i32, %arg1: i32, %arg2: memref<16x32xbf16, #tpu.memory_space<vmem>>, %arg3: memref<32x128xbf16, #tpu.memory_space<vmem>>, %arg4: memref<1x128xf32, #tpu.memory_space<vmem>>, %arg5: memref<16x128xf32, #tpu.memory_space<vmem>>) attributes {dimension_semantics = [#tpu.dimension_semantics<parallel>, #tpu.dimension_semantics<parallel>], iteration_bounds = array<i64: 1, 1>, scalar_prefetch = 0 : i64, scratch_operands = 0 : i64, tpu.core_type = #tpu.core_type<tc>, window_params = [{transform_indices = @transform_0, window_bounds = array<i64: 16, 32>}, {transform_indices = @transform_1, window_bounds = array<i64: 32, 128>}, {transform_indices = @transform_2, window_bounds = array<i64: 1, 128>}, {transform_indices = @transform_3, window_bounds = array<i64: 16, 128>}]} {
    %c0 = arith.constant 0 : index
    %c0_0 = arith.constant 0 : index
    %0 = vector.load %arg2[%c0, %c0_0] : memref<16x32xbf16, #tpu.memory_space<vmem>>, vector<16x32xbf16>
    %c0_1 = arith.constant 0 : index
    %c0_2 = arith.constant 0 : index
    %1 = vector.load %arg3[%c0_1, %c0_2] : memref<32x128xbf16, #tpu.memory_space<vmem>>, vector<32x128xbf16>
    %cst = arith.constant dense<0.000000e+00> : vector<16x128xf32>
    %2 = tpu.matmul %0, %1, %cst {dimension_numbers = #tpu.dot_dimension_numbers<[1], [0], [0], [1], [0, 0, 1, 1], [], []>} : vector<16x32xbf16>, vector<32x128xbf16>, vector<16x128xf32> -> vector<16x128xf32>
    %c0_3 = arith.constant 0 : index
    %c0_4 = arith.constant 0 : index
    %3 = vector.load %arg4[%c0_3, %c0_4] : memref<1x128xf32, #tpu.memory_space<vmem>>, vector<1x128xf32>
    %4 = vector.broadcast %3 : vector<1x128xf32> to vector<16x128xf32>
    %5 = arith.addf %2, %4 : vector<16x128xf32>
    %c0_5 = arith.constant 0 : index
    %c0_6 = arith.constant 0 : index
    %6 = vector.load %arg5[%c0_5, %c0_6] : memref<16x128xf32, #tpu.memory_space<vmem>>, vector<16x128xf32>
    tpu.vector_store %arg5[%c0_5, %c0_6], %5 {strides = array<i32>} : memref<16x128xf32, #tpu.memory_space<vmem>>, vector<16x128xf32>,
    return
  }
  func.func @transform_0(%arg0: i32, %arg1: i32) -> (i32, i32) {
    %c0_i32 = arith.constant 0 : i32
    %c0_i32_0 = arith.constant 0 : i32
    return %arg0, %c0_i32 : i32, i32
  }
  func.func @transform_1(%arg0: i32, %arg1: i32) -> (i32, i32) {
    %c0_i32 = arith.constant 0 : i32
    %c0_i32_0 = arith.constant 0 : i32
    return %c0_i32, %arg1 : i32, i32
  }
  func.func @transform_2(%arg0: i32, %arg1: i32) -> (i32, i32) {
    %c0_i32 = arith.constant 0 : i32
    %c0_i32_0 = arith.constant 0 : i32
    return %c0_i32, %arg1 : i32, i32
  }
  func.func @transform_3(%arg0: i32, %arg1: i32) -> (i32, i32) {
    %c0_i32 = arith.constant 0 : i32
    return %arg0, %arg1 : i32, i32
  }
}

</mosaic_0001>

<llo_original>
// kernel: tpu_custom_call.1
$region0: #{tpu_custom_call.1}
  #allocation0 [shape = 'u32[]', space=smem, size = 0x4, offset = 0x4, fixed_abs, tag = 'smem constant byte address 0x4 - core index']
  #allocation1 [shape = 'u32[144,128]{1,0:T(1,128)}', space=vmem, size = 0x12000, scoped, tag = 'internal scratch']
  %s0 = inlined_call_operand.hbm [shape: bf16[16,32], index: 0, kind: input, shape index: {}]
  %s1 = inlined_call_operand.hbm [shape: bf16[32,128], index: 1, kind: input, shape index: {}]
  %s2 = inlined_call_operand.vmem [shape: f32[1,128], index: 2, kind: input, shape index: {}]
  %s3 = inlined_call_operand.hbm [shape: f32[16,128], index: 3, kind: output, shape index: {}]
  %s4 = sld [smem:[#allocation0]]
  $region30: #{tpu_custom_call.1} parent=0
    _
  %s6 = ssub.s32 1, %s4
  %s7 = scalar_select 0, %s6, %s4
  $region1: #{tpu_custom_call.1} parent=0
    #allocation2 [shape = 'u8[4096]{0}', space=vmem, size = 0x1000, scoped, tag = 'input window, operand 0, single buffered']
    #allocation3 [shape = 's32[1]{0}', space=sflag, size = 0x4, scoped, tag = 'scoped memory for tpu_custom_call.1']
    #allocation4 [shape = 's32[1]{0}', space=sflag, size = 0x4, scoped, tag = 'scoped memory for tpu_custom_call.1']
    #allocation5 [shape = 'u8[8192]{0}', space=vmem, size = 0x2000, scoped, tag = 'input window, operand 1, single buffered']
    #allocation6 [shape = 's32[1]{0}', space=sflag, size = 0x4, scoped, tag = 'scoped memory for tpu_custom_call.1']
    #allocation7 [shape = 'u8[8192]{0}', space=vmem, size = 0x2000, scoped, tag = 'output window, operand 0, single buffered']
    %8 = vsyncpa [#allocation3], 0
    %9 = vsyncpa [#allocation6], 0
    %10 = vsyncpa [#allocation4], 0
    // Predicated region
    $region2: #{tpu_custom_call.1} parent=1 // pred_check
      _
    $region3: #{tpu_custom_call.1} parent=1 // pred_check_branch
      %12 = sbr.rel (0) target = $region5
    $region4: #{tpu_custom_call.1} parent=1 // pred_region
      %s14 = ssub.s32 128, 128
      %15 = vsyncadd [#allocation3], %s14
      %s16 = sshll.u32 [#allocation2], 4
      %s17 = int_to_ptr.vmem [resolvable:$true] %s16
      %22 = dma.hbm_to_vmem [thread:$0]  %s0, 128, %s17, [#allocation3], 64, 64, 4
    $region5: #{tpu_custom_call.1} parent=1 // pred_fallthru
      _
    // Predicated region
    $region6: #{tpu_custom_call.1} parent=1 // pred_check
      _
    $region7: #{tpu_custom_call.1} parent=1 // pred_check_branch
      %24 = sbr.rel (0) target = $region9
    $region8: #{tpu_custom_call.1} parent=1 // pred_region
      %s26 = ssub.s32 256, 256
      %27 = vsyncadd [#allocation6], %s26
      %s28 = sshll.u32 [#allocation5], 4
      %s29 = int_to_ptr.vmem [resolvable:$true] %s28
      %34 = dma.hbm_to_vmem [thread:$0]  %s1, 256, %s29, [#allocation6], 64, 64, 4
    $region9: #{tpu_custom_call.1} parent=1 // pred_fallthru
      _
    // Predicated region
    $region10: #{tpu_custom_call.1} parent=1 // pred_check
      _
    $region11: #{tpu_custom_call.1} parent=1 // pred_check_branch
      %36 = sbr.rel (0) target = $region13
    $region12: #{tpu_custom_call.1} parent=1 // pred_region
      _
    $region13: #{tpu_custom_call.1} parent=1 // pred_fallthru
      _
    // Predicated region
    $region14: #{tpu_custom_call.1} parent=1 // pred_check
      _
    $region15: #{tpu_custom_call.1} parent=1 // pred_check_branch
      %38 = sbr.rel (0) target = $region17
    $region16: #{tpu_custom_call.1} parent=1 // pred_region
      %39 = dma.done [#allocation3], 128
    $region17: #{tpu_custom_call.1} parent=1 // pred_fallthru
      _
    // Predicated region
    $region18: #{tpu_custom_call.1} parent=1 // pred_check
      _
    $region19: #{tpu_custom_call.1} parent=1 // pred_check_branch
      %41 = sbr.rel (0) target = $region21
    $region20: #{tpu_custom_call.1} parent=1 // pred_region
      %42 = dma.done [#allocation6], 256
    $region21: #{tpu_custom_call.1} parent=1 // pred_fallthru
      _
    %v44 = vld [vmem:[#allocation2] sm:$0xf]
    %v45 = vld [vmem:[#allocation2 + $0x4] sm:$0xf]
    %v46 = vld [vmem:[#allocation5] sm:$0xf]
    %v47 = vld [vmem:[#allocation5 + $0x4] sm:$0xf]
    %v48 = vld [vmem:[#allocation5 + $0x8] sm:$0xf]
    %v49 = vld [vmem:[#allocation5 + $0xc] sm:$0xf]
    %v50 = vld [vmem:[%s2] sm:$0x1]
    %v52 = vlaneseq
    %v53 = vshrl.u32 %v52, 7
    %v54 = vsub.s32 0, %v53
    %v55 = vrot.slane %v50, %v54
    %v59 = vunpack.c.l.b16 %v44
    %v60 = vunpack.c.l.b16 %v45
    %v61 = vpack.c.b16 %v60, %v59
    %v66 = vunpack.c.l.b16 %v46
    %v67 = vunpack.c.l.b16 %v47
    %v68 = vunpack.c.l.b16 %v48
    %v69 = vunpack.c.l.b16 %v49
    %v70 = vpack.c.b16 %v67, %v66
    %v71 = vpack.c.b16 %v69, %v68
    %vm74 = vcmask 261120
    %v76 = vsel %vm74, %v61, 0
    %78 = vmatprep.subr.bf16.mxu0 0
    %79 = vmatpush1.bf16.msra.mxu0 %v70
    %80 = vmatprep.subr.bf16.mxu0 0
    %81 = vmatpush1.bf16.msra.mxu0 %v71
    %82 = vmatprep.subr.bf16.mxu0 0
    %83 = vmatpush1.bf16.msra.mxu0 0
    %84 = vmatprep.subr.bf16.mxu0 0
    %85 = vmatpush1.bf16.msra.mxu0 0
    %86 = vmatprep.subr.bf16.mxu0 0
    %87 = vmatpush1.bf16.msra.mxu0 0
    %88 = vmatprep.subr.bf16.mxu0 0
    %89 = vmatpush1.bf16.msra.mxu0 0
    %90 = vmatprep.subr.bf16.mxu0 0
    %91 = vmatpush1.bf16.msra.mxu0 0
    %92 = vmatprep.subr.bf16.mxu0 0
    %93 = vmatpush1.bf16.msra.mxu0 0
    %94 = vmatprep.subr.bf16.mxu0 0
    %95 = vmatpush1.bf16.msra.mxu0 0
    %96 = vmatprep.subr.bf16.mxu0 0
    %97 = vmatpush1.bf16.msra.mxu0 0
    %98 = vmatprep.subr.bf16.mxu0 0
    %99 = vmatpush1.bf16.msra.mxu0 0
    %100 = vmatprep.subr.bf16.mxu0 0
    %101 = vmatpush1.bf16.msra.mxu0 0
    %102 = vmatprep.subr.bf16.mxu0 0
    %103 = vmatpush1.bf16.msra.mxu0 0
    %104 = vmatprep.subr.bf16.mxu0 0
    %105 = vmatpush1.bf16.msra.mxu0 0
    %106 = vmatprep.subr.bf16.mxu0 0
    %107 = vmatpush1.bf16.msra.mxu0 0
    %108 = vmatprep.subr.bf16.mxu0 0
    %109 = vmatpush1.bf16.msra.mxu0 0
    %110 = vmatprep.mubr.bf16.mxu0 0
    %111 = vmatmul.mubr.bf16.gmra.mrb[0].mxu0 %v76
    %v112 = vpop.f32.mrb[0].mxu0
    %v113 = vadd.f32 %v55, %v112
    %v114 = vpop.f32.mrb[0].mxu0
    %v115 = vpop.f32.mrb[0].mxu0
    %v116 = vadd.f32 %v55, %v115
    %v117 = vpop.f32.mrb[0].mxu0
    %118 = vdwg.mxu0
    %119 = vst [vmem:[#allocation7] sm:$0xff] %v113
    %120 = vst [vmem:[#allocation7 + $0x8] sm:$0xff] %v116
    // Predicated region
    $region22: #{tpu_custom_call.1} parent=1 // pred_check
      _
    $region23: #{tpu_custom_call.1} parent=1 // pred_check_branch
      %122 = sbr.rel (0) target = $region25
    $region24: #{tpu_custom_call.1} parent=1 // pred_region
      %s124 = ssub.s32 256, 256
      %125 = vsyncadd [#allocation4], %s124
      %s126 = sshll.u32 [#allocation7], 4
      %s127 = int_to_ptr.vmem [resolvable:$true] %s126
      %132 = dma.vmem_to_hbm [thread:$0]  %s127, 256, %s3, [#allocation4], 128, 128, 8
    $region25: #{tpu_custom_call.1} parent=1 // pred_fallthru
      _
    // Predicated region
    $region26: #{tpu_custom_call.1} parent=1 // pred_check
      _
    $region27: #{tpu_custom_call.1} parent=1 // pred_check_branch
      %134 = sbr.rel (0) target = $region29
    $region28: #{tpu_custom_call.1} parent=1 // pred_region
      %135 = dma.done [#allocation4], 256
    $region29: #{tpu_custom_call.1} parent=1 // pred_fallthru
      _
    %136 = vsyncpa [#allocation3], 1
    %137 = vsyncpa [#allocation6], 1
    %138 = vsyncpa [#allocation4], 1

</llo_original>
